<compile_context>
chip_gen: v7x
topology: tpu7x:2x2x1
jax: 0.10.0
libtpu: 0.0.40
codegen_flags: <defaults>
</compile_context>

<pallas_src>
import jax
import jax.numpy as jnp
from jax import lax
from jax.experimental import pallas as pl
from jax.experimental.pallas import tpu as pltpu


def rnn_softmax_kernel(px_ref, whh_ref, out_ref):
    """Serial RNN recurrence + softmax of the last hidden state.

    px_ref : (T, B, H) f32   pre-activations x_t @ W_ih + b (gathered in wrapper)
    whh_ref: (H, H)   bf16   recurrent weights (stationary across steps)
    out_ref: (B, H)   f32    softmax(h_T, axis=1)
    """
    T, B, H = px_ref.shape
    whh = whh_ref[...]                      # loaded once, stays resident

    def step(t, h):
        # Only MXU op on the serial chain: h_{t-1} @ W_hh (bf16 in, f32 acc).
        hh = jnp.dot(h.astype(jnp.bfloat16), whh,
                     preferred_element_type=jnp.float32)
        return jnp.tanh(px_ref[t] + hh)     # elementwise kept in f32

    h_last = lax.fori_loop(0, T, step,
                           jnp.zeros((B, H), jnp.float32),
                           unroll=True)     # T is static -> full unroll

    # Softmax along dim=1 (hidden dim), matching nn.Softmax(dim=1) on (B, H).
    m = jnp.max(h_last, axis=1, keepdims=True)
    e = jnp.exp(h_last - m)
    s = jnp.sum(e, axis=1, keepdims=True)
    out_ref[...] = e * pl.reciprocal(s, approx=True)   # EUP reciprocal


def rnn_forward(token_ids, emb_table, w_ih, w_hh, b_ih, b_hh, h0=None):
    """Wrapper: fold W_ih + bias into the embedding table, gather, run kernel."""
    B, T = token_ids.shape
    H = w_hh.shape[1]

    # Fold input projection + combined bias into the (tiny) embedding table.
    # padding_idx rows of emb_table are zero, so M[padding_idx] == bias, which
    # matches PyTorch (zero embedding still feeds the bias into the RNN cell).
    M = (emb_table.astype(jnp.float32) @ w_ih.astype(jnp.float32)
         + (b_ih + b_hh).astype(jnp.float32)[None, :])            # (V, H)

    # Gather time-major pre-activations directly: (T, B, H). No (B,T,E)
    # transpose of a big activation tensor; only the tiny id matrix transposes.
    pre_x = jnp.take(M, token_ids.T, axis=0)                      # (T, B, H)

    if h0 is not None:
        # Fold a non-zero initial hidden state into step 0's pre-activation so
        # the kernel can always start from zeros (no h0 DMA).
        pre_x = pre_x.at[0].add(h0.astype(jnp.float32) @ w_hh.astype(jnp.float32))

    vmem = pl.BlockSpec(memory_space=pltpu.MemorySpace.VMEM)
    out = pl.pallas_call(
        rnn_softmax_kernel,
        out_shape=jax.ShapeDtypeStruct((B, H), jnp.float32),
        in_specs=[vmem, vmem],
        out_specs=vmem,
    )(pre_x, w_hh.astype(jnp.bfloat16))
    return out


def rnn_forward_ref(token_ids, emb_table, w_ih, w_hh, b_ih, b_hh, h0=None):
    """Pure-JAX f32 reference mirroring the PyTorch forward (for sanity check)."""
    B, T = token_ids.shape
    H = w_hh.shape[1]
    x = jnp.take(emb_table, token_ids, axis=0).astype(jnp.float32)   # (B, T, E)
    h = jnp.zeros((B, H), jnp.float32) if h0 is None else h0.astype(jnp.float32)
    b = (b_ih + b_hh).astype(jnp.float32)
    for t in range(T):
        h = jnp.tanh(x[:, t, :] @ w_ih + h @ w_hh + b)
    return jax.nn.softmax(h, axis=1)


def init_params(key, vocab_size, emb_size, hidden_size, output_size, padding_idx):
    """Deterministic parameter init mimicking PyTorch defaults (shapes only)."""
    k_emb, k_wih, k_whh, k_bih, k_bhh, k_fw, k_fb = jax.random.split(key, 7)
    emb = jax.random.normal(k_emb, (vocab_size, emb_size), jnp.float32)
    emb = emb.at[padding_idx].set(0.0)                  # padding_idx row zeroed

    bound = 1.0 / jnp.sqrt(hidden_size)
    w_ih = jax.random.uniform(k_wih, (emb_size, hidden_size), jnp.float32, -bound, bound)
    w_hh = jax.random.uniform(k_whh, (hidden_size, hidden_size), jnp.float32, -bound, bound)
    b_ih = jax.random.uniform(k_bih, (hidden_size,), jnp.float32, -bound, bound)
    b_hh = jax.random.uniform(k_bhh, (hidden_size,), jnp.float32, -bound, bound)

    # fc params exist in the module but its output is dead code in forward().
    fc_w = jax.random.uniform(k_fw, (hidden_size, output_size), jnp.float32, -bound, bound)
    fc_b = jax.random.uniform(k_fb, (output_size,), jnp.float32, -bound, bound)
    return emb, w_ih, w_hh, b_ih, b_hh, fc_w, fc_b


if __name__ == "__main__":
    # Small shapes consistent with the module.
    vocab_size, emb_size, hidden_size, output_size = 50, 32, 32, 8
    padding_idx = 0
    B, T = 4, 8

    key = jax.random.PRNGKey(0)
    k_params, k_ids = jax.random.split(key)
    emb, w_ih, w_hh, b_ih, b_hh, fc_w, fc_b = init_params(
        k_params, vocab_size, emb_size, hidden_size, output_size, padding_idx)

    token_ids = jax.random.randint(k_ids, (B, T), 0, vocab_size, dtype=jnp.int32)

    out = rnn_forward(token_ids, emb, w_ih, w_hh, b_ih, b_hh)
    out = jax.block_until_ready(out)

    # Sanity: shape, softmax rows sum ~ 1 (approx reciprocal), matches f32 ref.
    assert out.shape == (B, hidden_size)
    assert jnp.allclose(jnp.sum(out, axis=1), 1.0, atol=1e-2)
    ref = rnn_forward_ref(token_ids, emb, w_ih, w_hh, b_ih, b_hh)
    assert jnp.allclose(out, ref, atol=1e-2), float(jnp.max(jnp.abs(out - ref)))
    print("KERNEL_OK")
</pallas_src>

<mosaic_0001>
module attributes {stable_mosaic.version = 11 : i64} {
  func.func @rnn_softmax_kernel(%arg0: memref<8x4x32xf32, #tpu.memory_space<vmem>>, %arg1: memref<32x32xbf16, #tpu.memory_space<vmem>>, %arg2: memref<4x32xf32, #tpu.memory_space<vmem>>) attributes {dimension_semantics = [], scalar_prefetch = 0 : i64, scratch_operands = 0 : i64, tpu.core_type = #tpu.core_type<tc>} {
    %c0 = arith.constant 0 : index
    %c0_0 = arith.constant 0 : index
    %0 = vector.load %arg1[%c0, %c0_0] : memref<32x32xbf16, #tpu.memory_space<vmem>>, vector<32x32xbf16>
    %cst = arith.constant 0.000000e+00 : f32
    %1 = vector.broadcast %cst : f32 to vector<4x32xf32>
    %c0_i32 = arith.constant 0 : i32
    %2 = arith.truncf %1 : vector<4x32xf32> to vector<4x32xbf16>
    %cst_1 = arith.constant dense<0.000000e+00> : vector<4x32xf32>
    %3 = tpu.matmul %2, %0, %cst_1 {dimension_numbers = #tpu.dot_dimension_numbers<[1], [0], [0], [1], [0, 0, 1, 1], [], []>} : vector<4x32xbf16>, vector<32x32xbf16>, vector<4x32xf32> -> vector<4x32xf32>
    %4 = arith.index_cast %c0_i32 : i32 to index
    %c0_2 = arith.constant 0 : index
    %c0_3 = arith.constant 0 : index
    %5 = vector.load %arg0[%4, %c0_2, %c0_3] : memref<8x4x32xf32, #tpu.memory_space<vmem>>, vector<1x4x32xf32>
    %6 = vector.shape_cast %5 : vector<1x4x32xf32> to vector<4x32xf32>
    %7 = arith.addf %6, %3 : vector<4x32xf32>
    %8 = math.tanh %7 : vector<4x32xf32>
    %c1_i32 = arith.constant 1 : i32
    %9 = arith.truncf %8 : vector<4x32xf32> to vector<4x32xbf16>
    %cst_4 = arith.constant dense<0.000000e+00> : vector<4x32xf32>
    %10 = tpu.matmul %9, %0, %cst_4 {dimension_numbers = #tpu.dot_dimension_numbers<[1], [0], [0], [1], [0, 0, 1, 1], [], []>} : vector<4x32xbf16>, vector<32x32xbf16>, vector<4x32xf32> -> vector<4x32xf32>
    %11 = arith.index_cast %c1_i32 : i32 to index
    %c0_5 = arith.constant 0 : index
    %c0_6 = arith.constant 0 : index
    %12 = vector.load %arg0[%11, %c0_5, %c0_6] : memref<8x4x32xf32, #tpu.memory_space<vmem>>, vector<1x4x32xf32>
    %13 = vector.shape_cast %12 : vector<1x4x32xf32> to vector<4x32xf32>
    %14 = arith.addf %13, %10 : vector<4x32xf32>
    %15 = math.tanh %14 : vector<4x32xf32>
    %c2_i32 = arith.constant 2 : i32
    %16 = arith.truncf %15 : vector<4x32xf32> to vector<4x32xbf16>
    %cst_7 = arith.constant dense<0.000000e+00> : vector<4x32xf32>
    %17 = tpu.matmul %16, %0, %cst_7 {dimension_numbers = #tpu.dot_dimension_numbers<[1], [0], [0], [1], [0, 0, 1, 1], [], []>} : vector<4x32xbf16>, vector<32x32xbf16>, vector<4x32xf32> -> vector<4x32xf32>
    %18 = arith.index_cast %c2_i32 : i32 to index
    %c0_8 = arith.constant 0 : index
    %c0_9 = arith.constant 0 : index
    %19 = vector.load %arg0[%18, %c0_8, %c0_9] : memref<8x4x32xf32, #tpu.memory_space<vmem>>, vector<1x4x32xf32>
    %20 = vector.shape_cast %19 : vector<1x4x32xf32> to vector<4x32xf32>
    %21 = arith.addf %20, %17 : vector<4x32xf32>
    %22 = math.tanh %21 : vector<4x32xf32>
    %c3_i32 = arith.constant 3 : i32
    %23 = arith.truncf %22 : vector<4x32xf32> to vector<4x32xbf16>
    %cst_10 = arith.constant dense<0.000000e+00> : vector<4x32xf32>
    %24 = tpu.matmul %23, %0, %cst_10 {dimension_numbers = #tpu.dot_dimension_numbers<[1], [0], [0], [1], [0, 0, 1, 1], [], []>} : vector<4x32xbf16>, vector<32x32xbf16>, vector<4x32xf32> -> vector<4x32xf32>
    %25 = arith.index_cast %c3_i32 : i32 to index
    %c0_11 = arith.constant 0 : index
    %c0_12 = arith.constant 0 : index
    %26 = vector.load %arg0[%25, %c0_11, %c0_12] : memref<8x4x32xf32, #tpu.memory_space<vmem>>, vector<1x4x32xf32>
    %27 = vector.shape_cast %26 : vector<1x4x32xf32> to vector<4x32xf32>
    %28 = arith.addf %27, %24 : vector<4x32xf32>
    %29 = math.tanh %28 : vector<4x32xf32>
    %c4_i32 = arith.constant 4 : i32
    %30 = arith.truncf %29 : vector<4x32xf32> to vector<4x32xbf16>
    %cst_13 = arith.constant dense<0.000000e+00> : vector<4x32xf32>
    %31 = tpu.matmul %30, %0, %cst_13 {dimension_numbers = #tpu.dot_dimension_numbers<[1], [0], [0], [1], [0, 0, 1, 1], [], []>} : vector<4x32xbf16>, vector<32x32xbf16>, vector<4x32xf32> -> vector<4x32xf32>
    %32 = arith.index_cast %c4_i32 : i32 to index
    %c0_14 = arith.constant 0 : index
    %c0_15 = arith.constant 0 : index
    %33 = vector.load %arg0[%32, %c0_14, %c0_15] : memref<8x4x32xf32, #tpu.memory_space<vmem>>, vector<1x4x32xf32>
    %34 = vector.shape_cast %33 : vector<1x4x32xf32> to vector<4x32xf32>
    %35 = arith.addf %34, %31 : vector<4x32xf32>
    %36 = math.tanh %35 : vector<4x32xf32>
    %c5_i32 = arith.constant 5 : i32
    %37 = arith.truncf %36 : vector<4x32xf32> to vector<4x32xbf16>
    %cst_16 = arith.constant dense<0.000000e+00> : vector<4x32xf32>
    %38 = tpu.matmul %37, %0, %cst_16 {dimension_numbers = #tpu.dot_dimension_numbers<[1], [0], [0], [1], [0, 0, 1, 1], [], []>} : vector<4x32xbf16>, vector<32x32xbf16>, vector<4x32xf32> -> vector<4x32xf32>
    %39 = arith.index_cast %c5_i32 : i32 to index
    %c0_17 = arith.constant 0 : index
    %c0_18 = arith.constant 0 : index
    %40 = vector.load %arg0[%39, %c0_17, %c0_18] : memref<8x4x32xf32, #tpu.memory_space<vmem>>, vector<1x4x32xf32>
    %41 = vector.shape_cast %40 : vector<1x4x32xf32> to vector<4x32xf32>
    %42 = arith.addf %41, %38 : vector<4x32xf32>
    %43 = math.tanh %42 : vector<4x32xf32>
    %c6_i32 = arith.constant 6 : i32
    %44 = arith.truncf %43 : vector<4x32xf32> to vector<4x32xbf16>
    %cst_19 = arith.constant dense<0.000000e+00> : vector<4x32xf32>
    %45 = tpu.matmul %44, %0, %cst_19 {dimension_numbers = #tpu.dot_dimension_numbers<[1], [0], [0], [1], [0, 0, 1, 1], [], []>} : vector<4x32xbf16>, vector<32x32xbf16>, vector<4x32xf32> -> vector<4x32xf32>
    %46 = arith.index_cast %c6_i32 : i32 to index
    %c0_20 = arith.constant 0 : index
    %c0_21 = arith.constant 0 : index
    %47 = vector.load %arg0[%46, %c0_20, %c0_21] : memref<8x4x32xf32, #tpu.memory_space<vmem>>, vector<1x4x32xf32>
    %48 = vector.shape_cast %47 : vector<1x4x32xf32> to vector<4x32xf32>
    %49 = arith.addf %48, %45 : vector<4x32xf32>
    %50 = math.tanh %49 : vector<4x32xf32>
    %c7_i32 = arith.constant 7 : i32
    %51 = arith.truncf %50 : vector<4x32xf32> to vector<4x32xbf16>
    %cst_22 = arith.constant dense<0.000000e+00> : vector<4x32xf32>
    %52 = tpu.matmul %51, %0, %cst_22 {dimension_numbers = #tpu.dot_dimension_numbers<[1], [0], [0], [1], [0, 0, 1, 1], [], []>} : vector<4x32xbf16>, vector<32x32xbf16>, vector<4x32xf32> -> vector<4x32xf32>
    %53 = arith.index_cast %c7_i32 : i32 to index
    %c0_23 = arith.constant 0 : index
    %c0_24 = arith.constant 0 : index
    %54 = vector.load %arg0[%53, %c0_23, %c0_24] : memref<8x4x32xf32, #tpu.memory_space<vmem>>, vector<1x4x32xf32>
    %55 = vector.shape_cast %54 : vector<1x4x32xf32> to vector<4x32xf32>
    %56 = arith.addf %55, %52 : vector<4x32xf32>
    %57 = math.tanh %56 : vector<4x32xf32>
    %c8_i32 = arith.constant 8 : i32
    %cst_25 = arith.constant dense<0xFF800000> : vector<4xf32>
    %58 = vector.multi_reduction <maximumf>, %57, %cst_25 [1] : vector<4x32xf32> to vector<4xf32>
    %59 = vector.shape_cast %58 : vector<4xf32> to vector<4x1xf32>
    %60 = vector.broadcast %59 : vector<4x1xf32> to vector<4x32xf32>
    %61 = arith.subf %57, %60 : vector<4x32xf32>
    %62 = math.exp %61 : vector<4x32xf32>
    %cst_26 = arith.constant dense<0.000000e+00> : vector<4xf32>
    %63 = vector.multi_reduction <add>, %62, %cst_26 [1] : vector<4x32xf32> to vector<4xf32>
    %64 = vector.shape_cast %63 : vector<4xf32> to vector<4x1xf32>
    %65 = tpu.reciprocal %64 {approx = true} : vector<4x1xf32> -> vector<4x1xf32>
    %66 = vector.broadcast %65 : vector<4x1xf32> to vector<4x32xf32>
    %67 = arith.mulf %62, %66 : vector<4x32xf32>
    %c0_27 = arith.constant 0 : index
    %c0_28 = arith.constant 0 : index
    %68 = vector.load %arg2[%c0_27, %c0_28] : memref<4x32xf32, #tpu.memory_space<vmem>>, vector<4x32xf32>
    tpu.vector_store %arg2[%c0_27, %c0_28], %67 {strides = array<i32>} : memref<4x32xf32, #tpu.memory_space<vmem>>, vector<4x32xf32>,
    return
  }
}

</mosaic_0001>

<llo_original>
// kernel: tpu_custom_call.1
$region0: #{tpu_custom_call.1}
  #allocation0 [shape = 'u32[]', space=smem, size = 0x4, offset = 0x4, fixed_abs, tag = 'smem constant byte address 0x4 - core index']
  #allocation1 [shape = 'u32[144,128]{1,0:T(1,128)}', space=vmem, size = 0x12000, scoped, tag = 'internal scratch']
  %s0 = inlined_call_operand.hbm [shape: f32[8,4,32], index: 0, kind: input, shape index: {}]
  %s1 = inlined_call_operand.hbm [shape: bf16[32,32], index: 1, kind: input, shape index: {}]
  %s2 = inlined_call_operand.hbm [shape: f32[4,32], index: 2, kind: output, shape index: {}]
  %s3 = sld [smem:[#allocation0]]
  $region26: #{tpu_custom_call.1} parent=0
    _
  %s5 = ssub.s32 1, %s3
  %s6 = scalar_select 0, %s5, %s3
  $region1: #{tpu_custom_call.1} parent=0
    #allocation2 [shape = 'u8[16384]{0}', space=vmem, size = 0x4000, scoped, tag = 'input window, operand 0, single buffered']
    #allocation3 [shape = 's32[1]{0}', space=sflag, size = 0x4, scoped, tag = 'scoped memory for tpu_custom_call.1']
    #allocation4 [shape = 's32[1]{0}', space=sflag, size = 0x4, scoped, tag = 'scoped memory for tpu_custom_call.1']
    #allocation5 [shape = 'u8[8192]{0}', space=vmem, size = 0x2000, scoped, tag = 'input window, operand 1, single buffered']
    #allocation6 [shape = 's32[1]{0}', space=sflag, size = 0x4, scoped, tag = 'scoped memory for tpu_custom_call.1']
    #allocation7 [shape = 'u8[2048]{0}', space=vmem, size = 0x800, scoped, tag = 'output window, operand 0, single buffered']
    %7 = vsyncpa [#allocation3], 0
    %8 = vsyncpa [#allocation6], 0
    %9 = vsyncpa [#allocation4], 0
    // Predicated region
    $region2: #{tpu_custom_call.1} parent=1 // pred_check
      _
    $region3: #{tpu_custom_call.1} parent=1 // pred_check_branch
      %11 = sbr.rel (0) target = $region5
    $region4: #{tpu_custom_call.1} parent=1 // pred_region
      %s13 = ssub.s32 512, 512
      %14 = vsyncadd [#allocation3], %s13
      %s15 = sshll.u32 [#allocation2], 4
      %s16 = int_to_ptr.vmem [resolvable:$true] %s15
      %21 = dma.hbm_to_vmem [thread:$0]  %s0, 512, %s16, [#allocation3], 64, 64, 4
    $region5: #{tpu_custom_call.1} parent=1 // pred_fallthru
      _
    // Predicated region
    $region6: #{tpu_custom_call.1} parent=1 // pred_check
      _
    $region7: #{tpu_custom_call.1} parent=1 // pred_check_branch
      %23 = sbr.rel (0) target = $region9
    $region8: #{tpu_custom_call.1} parent=1 // pred_region
      %s25 = ssub.s32 256, 256
      %26 = vsyncadd [#allocation6], %s25
      %s27 = sshll.u32 [#allocation5], 4
      %s28 = int_to_ptr.vmem [resolvable:$true] %s27
      %33 = dma.hbm_to_vmem [thread:$0]  %s1, 256, %s28, [#allocation6], 64, 64, 4
    $region9: #{tpu_custom_call.1} parent=1 // pred_fallthru
      _
    // Predicated region
    $region10: #{tpu_custom_call.1} parent=1 // pred_check
      _
    $region11: #{tpu_custom_call.1} parent=1 // pred_check_branch
      %35 = sbr.rel (0) target = $region13
    $region12: #{tpu_custom_call.1} parent=1 // pred_region
      %36 = dma.done [#allocation3], 512
    $region13: #{tpu_custom_call.1} parent=1 // pred_fallthru
      _
    // Predicated region
    $region14: #{tpu_custom_call.1} parent=1 // pred_check
      _
    $region15: #{tpu_custom_call.1} parent=1 // pred_check_branch
      %38 = sbr.rel (0) target = $region17
    $region16: #{tpu_custom_call.1} parent=1 // pred_region
      %39 = dma.done [#allocation6], 256
    $region17: #{tpu_custom_call.1} parent=1 // pred_fallthru
      _
    %v41 = vld [vmem:[#allocation5] sm:$0xf]
    %v42 = vld [vmem:[#allocation5 + $0x4] sm:$0xf]
    %v43 = vld [vmem:[#allocation5 + $0x8] sm:$0xf]
    %v44 = vld [vmem:[#allocation5 + $0xc] sm:$0xf]
    %v49 = vunpack.c.l.b16 %v41
    %v50 = vunpack.c.l.b16 %v42
    %v51 = vunpack.c.l.b16 %v43
    %v52 = vunpack.c.l.b16 %v44
    %v53 = vpack.c.b16 %v50, %v49
    %v54 = vpack.c.b16 %v52, %v51
    %vm57 = vcmask 261120
    %v59 = vsel %vm57, 0, 0
    %61 = vmatprep.subr.bf16.mxu0 0
    %62 = vmatpush1.bf16.msra.mxu0 %v53
    %63 = vmatprep.subr.bf16.mxu0 0
    %64 = vmatpush1.bf16.msra.mxu0 %v54
    %65 = vmatprep.subr.bf16.mxu0 0
    %66 = vmatpush1.bf16.msra.mxu0 0
    %67 = vmatprep.subr.bf16.mxu0 0
    %68 = vmatpush1.bf16.msra.mxu0 0
    %69 = vmatprep.subr.bf16.mxu0 0
    %70 = vmatpush1.bf16.msra.mxu0 0
    %71 = vmatprep.subr.bf16.mxu0 0
    %72 = vmatpush1.bf16.msra.mxu0 0
    %73 = vmatprep.subr.bf16.mxu0 0
    %74 = vmatpush1.bf16.msra.mxu0 0
    %75 = vmatprep.subr.bf16.mxu0 0
    %76 = vmatpush1.bf16.msra.mxu0 0
    %77 = vmatprep.subr.bf16.mxu0 0
    %78 = vmatpush1.bf16.msra.mxu0 0
    %79 = vmatprep.subr.bf16.mxu0 0
    %80 = vmatpush1.bf16.msra.mxu0 0
    %81 = vmatprep.subr.bf16.mxu0 0
    %82 = vmatpush1.bf16.msra.mxu0 0
    %83 = vmatprep.subr.bf16.mxu0 0
    %84 = vmatpush1.bf16.msra.mxu0 0
    %85 = vmatprep.subr.bf16.mxu0 0
    %86 = vmatpush1.bf16.msra.mxu0 0
    %87 = vmatprep.subr.bf16.mxu0 0
    %88 = vmatpush1.bf16.msra.mxu0 0
    %89 = vmatprep.subr.bf16.mxu0 0
    %90 = vmatpush1.bf16.msra.mxu0 0
    %91 = vmatprep.subr.bf16.mxu0 0
    %92 = vmatpush1.bf16.msra.mxu0 0
    %93 = vmatprep.mubr.bf16.mxu0 0
    %94 = vmatmul.mubr.bf16.gmra.mrb[0].mxu0 %v59
    %v95 = vpop.f32.mrb[0].mxu0
    %v96 = vadd.f32 0.0, %v95
    %v97 = vpop.f32.mrb[0].mxu0
    %v98 = vpop.f32.mrb[0].mxu0
    %v99 = vpop.f32.mrb[0].mxu0
    %100 = vdwg.mxu0
    %v101 = vld [vmem:[#allocation2] sm:$0xf]
    %v102 = vadd.f32 %v101, %v96
    %v103 = vtanh.pop %v102
    %v104 = vpack.c.bf16 %v103, %v103
    %v106 = vsel %vm57, %v104, 0
    %108 = vmatprep.subr.bf16.mxu0 0
    %109 = vmatpush1.bf16.msra.mxu0 %v53
    %110 = vmatprep.subr.bf16.mxu0 0
    %111 = vmatpush1.bf16.msra.mxu0 %v54
    %112 = vmatprep.subr.bf16.mxu0 0
    %113 = vmatpush1.bf16.msra.mxu0 0
    %114 = vmatprep.subr.bf16.mxu0 0
    %115 = vmatpush1.bf16.msra.mxu0 0
    %116 = vmatprep.subr.bf16.mxu0 0
    %117 = vmatpush1.bf16.msra.mxu0 0
    %118 = vmatprep.subr.bf16.mxu0 0
    %119 = vmatpush1.bf16.msra.mxu0 0
    %120 = vmatprep.subr.bf16.mxu0 0
    %121 = vmatpush1.bf16.msra.mxu0 0
    %122 = vmatprep.subr.bf16.mxu0 0
    %123 = vmatpush1.bf16.msra.mxu0 0
    %124 = vmatprep.subr.bf16.mxu0 0
    %125 = vmatpush1.bf16.msra.mxu0 0
    %126 = vmatprep.subr.bf16.mxu0 0
    %127 = vmatpush1.bf16.msra.mxu0 0
    %128 = vmatprep.subr.bf16.mxu0 0
    %129 = vmatpush1.bf16.msra.mxu0 0
    %130 = vmatprep.subr.bf16.mxu0 0
    %131 = vmatpush1.bf16.msra.mxu0 0
    %132 = vmatprep.subr.bf16.mxu0 0
    %133 = vmatpush1.bf16.msra.mxu0 0
    %134 = vmatprep.subr.bf16.mxu0 0
    %135 = vmatpush1.bf16.msra.mxu0 0
    %136 = vmatprep.subr.bf16.mxu0 0
    %137 = vmatpush1.bf16.msra.mxu0 0
    %138 = vmatprep.subr.bf16.mxu0 0
    %139 = vmatpush1.bf16.msra.mxu0 0
    %140 = vmatprep.mubr.bf16.mxu0 0
    %141 = vmatmul.mubr.bf16.gmra.mrb[0].mxu0 %v106
    %v142 = vpop.f32.mrb[0].mxu0
    %v143 = vadd.f32 0.0, %v142
    %v144 = vpop.f32.mrb[0].mxu0
    %v145 = vpop.f32.mrb[0].mxu0
    %v146 = vpop.f32.mrb[0].mxu0
    %147 = vdwg.mxu0
    %s148 = scalar_lea.vmem [#allocation2], 4
    %v149 = vld [vmem:[%s148] sm:$0xf]
    %v150 = vadd.f32 %v149, %v143
    %v151 = vtanh.pop %v150
    %v152 = vpack.c.bf16 %v151, %v151
    %v154 = vsel %vm57, %v152, 0
    %156 = vmatprep.subr.bf16.mxu0 0
    %157 = vmatpush1.bf16.msra.mxu0 %v53
    %158 = vmatprep.subr.bf16.mxu0 0
    %159 = vmatpush1.bf16.msra.mxu0 %v54
    %160 = vmatprep.subr.bf16.mxu0 0
    %161 = vmatpush1.bf16.msra.mxu0 0
    %162 = vmatprep.subr.bf16.mxu0 0
    %163 = vmatpush1.bf16.msra.mxu0 0
    %164 = vmatprep.subr.bf16.mxu0 0
    %165 = vmatpush1.bf16.msra.mxu0 0
    %166 = vmatprep.subr.bf16.mxu0 0
    %167 = vmatpush1.bf16.msra.mxu0 0
    %168 = vmatprep.subr.bf16.mxu0 0
    %169 = vmatpush1.bf16.msra.mxu0 0
    %170 = vmatprep.subr.bf16.mxu0 0
    %171 = vmatpush1.bf16.msra.mxu0 0
    %172 = vmatprep.subr.bf16.mxu0 0
    %173 = vmatpush1.bf16.msra.mxu0 0
    %174 = vmatprep.subr.bf16.mxu0 0
    %175 = vmatpush1.bf16.msra.mxu0 0
    %176 = vmatprep.subr.bf16.mxu0 0
    %177 = vmatpush1.bf16.msra.mxu0 0
    %178 = vmatprep.subr.bf16.mxu0 0
    %179 = vmatpush1.bf16.msra.mxu0 0
    %180 = vmatprep.subr.bf16.mxu0 0
    %181 = vmatpush1.bf16.msra.mxu0 0
    %182 = vmatprep.subr.bf16.mxu0 0
    %183 = vmatpush1.bf16.msra.mxu0 0
    %184 = vmatprep.subr.bf16.mxu0 0
    %185 = vmatpush1.bf16.msra.mxu0 0
    %186 = vmatprep.subr.bf16.mxu0 0
    %187 = vmatpush1.bf16.msra.mxu0 0
    %188 = vmatprep.mubr.bf16.mxu0 0
    %189 = vmatmul.mubr.bf16.gmra.mrb[0].mxu0 %v154
    %v190 = vpop.f32.mrb[0].mxu0
    %v191 = vadd.f32 0.0, %v190
    %v192 = vpop.f32.mrb[0].mxu0
    %v193 = vpop.f32.mrb[0].mxu0
    %v194 = vpop.f32.mrb[0].mxu0
    %195 = vdwg.mxu0
    %s196 = scalar_lea.vmem [#allocation2], 8
    %v197 = vld [vmem:[%s196] sm:$0xf]
    %v198 = vadd.f32 %v197, %v191
    %v199 = vtanh.pop %v198
    %v200 = vpack.c.bf16 %v199, %v199
    %v202 = vsel %vm57, %v200, 0
    %204 = vmatprep.subr.bf16.mxu0 0
    %205 = vmatpush1.bf16.msra.mxu0 %v53
    %206 = vmatprep.subr.bf16.mxu0 0
    %207 = vmatpush1.bf16.msra.mxu0 %v54
    %208 = vmatprep.subr.bf16.mxu0 0
    %209 = vmatpush1.bf16.msra.mxu0 0
    %210 = vmatprep.subr.bf16.mxu0 0
    %211 = vmatpush1.bf16.msra.mxu0 0
    %212 = vmatprep.subr.bf16.mxu0 0
    %213 = vmatpush1.bf16.msra.mxu0 0
    %214 = vmatprep.subr.bf16.mxu0 0
    %215 = vmatpush1.bf16.msra.mxu0 0
    %216 = vmatprep.subr.bf16.mxu0 0
    %217 = vmatpush1.bf16.msra.mxu0 0
    %218 = vmatprep.subr.bf16.mxu0 0
    %219 = vmatpush1.bf16.msra.mxu0 0
    %220 = vmatprep.subr.bf16.mxu0 0
    %221 = vmatpush1.bf16.msra.mxu0 0
    %222 = vmatprep.subr.bf16.mxu0 0
    %223 = vmatpush1.bf16.msra.mxu0 0
    %224 = vmatprep.subr.bf16.mxu0 0
    %225 = vmatpush1.bf16.msra.mxu0 0
    %226 = vmatprep.subr.bf16.mxu0 0
    %227 = vmatpush1.bf16.msra.mxu0 0
    %228 = vmatprep.subr.bf16.mxu0 0
    %229 = vmatpush1.bf16.msra.mxu0 0
    %230 = vmatprep.subr.bf16.mxu0 0
    %231 = vmatpush1.bf16.msra.mxu0 0
    %232 = vmatprep.subr.bf16.mxu0 0
    %233 = vmatpush1.bf16.msra.mxu0 0
    %234 = vmatprep.subr.bf16.mxu0 0
    %235 = vmatpush1.bf16.msra.mxu0 0
    %236 = vmatprep.mubr.bf16.mxu0 0
    %237 = vmatmul.mubr.bf16.gmra.mrb[0].mxu0 %v202
    %v238 = vpop.f32.mrb[0].mxu0
    %v239 = vadd.f32 0.0, %v238
    %v240 = vpop.f32.mrb[0].mxu0
    %v241 = vpop.f32.mrb[0].mxu0
    %v242 = vpop.f32.mrb[0].mxu0
    %243 = vdwg.mxu0
    %s244 = scalar_lea.vmem [#allocation2], 12
    %v245 = vld [vmem:[%s244] sm:$0xf]
    %v246 = vadd.f32 %v245, %v239
    %v247 = vtanh.pop %v246
    %v248 = vpack.c.bf16 %v247, %v247
    %v250 = vsel %vm57, %v248, 0
    %252 = vmatprep.subr.bf16.mxu0 0
    %253 = vmatpush1.bf16.msra.mxu0 %v53
    %254 = vmatprep.subr.bf16.mxu0 0
    %255 = vmatpush1.bf16.msra.mxu0 %v54
    %256 = vmatprep.subr.bf16.mxu0 0
    %257 = vmatpush1.bf16.msra.mxu0 0
    %258 = vmatprep.subr.bf16.mxu0 0
    %259 = vmatpush1.bf16.msra.mxu0 0
    %260 = vmatprep.subr.bf16.mxu0 0
    %261 = vmatpush1.bf16.msra.mxu0 0
    %262 = vmatprep.subr.bf16.mxu0 0
    %263 = vmatpush1.bf16.msra.mxu0 0
    %264 = vmatprep.subr.bf16.mxu0 0
    %265 = vmatpush1.bf16.msra.mxu0 0
    %266 = vmatprep.subr.bf16.mxu0 0
    %267 = vmatpush1.bf16.msra.mxu0 0
    %268 = vmatprep.subr.bf16.mxu0 0
    %269 = vmatpush1.bf16.msra.mxu0 0
    %270 = vmatprep.subr.bf16.mxu0 0
    %271 = vmatpush1.bf16.msra.mxu0 0
    %272 = vmatprep.subr.bf16.mxu0 0
    %273 = vmatpush1.bf16.msra.mxu0 0
    %274 = vmatprep.subr.bf16.mxu0 0
    %275 = vmatpush1.bf16.msra.mxu0 0
    %276 = vmatprep.subr.bf16.mxu0 0
    %277 = vmatpush1.bf16.msra.mxu0 0
    %278 = vmatprep.subr.bf16.mxu0 0
    %279 = vmatpush1.bf16.msra.mxu0 0
    %280 = vmatprep.subr.bf16.mxu0 0
    %281 = vmatpush1.bf16.msra.mxu0 0
    %282 = vmatprep.subr.bf16.mxu0 0
    %283 = vmatpush1.bf16.msra.mxu0 0
    %284 = vmatprep.mubr.bf16.mxu0 0
    %285 = vmatmul.mubr.bf16.gmra.mrb[0].mxu0 %v250
    %v286 = vpop.f32.mrb[0].mxu0
    %v287 = vadd.f32 0.0, %v286
    %v288 = vpop.f32.mrb[0].mxu0
    %v289 = vpop.f32.mrb[0].mxu0
    %v290 = vpop.f32.mrb[0].mxu0
    %291 = vdwg.mxu0
    %s292 = scalar_lea.vmem [#allocation2], 16
    %v293 = vld [vmem:[%s292] sm:$0xf]
    %v294 = vadd.f32 %v293, %v287
    %v295 = vtanh.pop %v294
    %v296 = vpack.c.bf16 %v295, %v295
    %v298 = vsel %vm57, %v296, 0
    %300 = vmatprep.subr.bf16.mxu0 0
    %301 = vmatpush1.bf16.msra.mxu0 %v53
    %302 = vmatprep.subr.bf16.mxu0 0
    %303 = vmatpush1.bf16.msra.mxu0 %v54
    %304 = vmatprep.subr.bf16.mxu0 0
    %305 = vmatpush1.bf16.msra.mxu0 0
    %306 = vmatprep.subr.bf16.mxu0 0
    %307 = vmatpush1.bf16.msra.mxu0 0
    %308 = vmatprep.subr.bf16.mxu0 0
    %309 = vmatpush1.bf16.msra.mxu0 0
    %310 = vmatprep.subr.bf16.mxu0 0
    %311 = vmatpush1.bf16.msra.mxu0 0
    %312 = vmatprep.subr.bf16.mxu0 0
    %313 = vmatpush1.bf16.msra.mxu0 0
    %314 = vmatprep.subr.bf16.mxu0 0
    %315 = vmatpush1.bf16.msra.mxu0 0
    %316 = vmatprep.subr.bf16.mxu0 0
    %317 = vmatpush1.bf16.msra.mxu0 0
    %318 = vmatprep.subr.bf16.mxu0 0
    %319 = vmatpush1.bf16.msra.mxu0 0
    %320 = vmatprep.subr.bf16.mxu0 0
    %321 = vmatpush1.bf16.msra.mxu0 0
    %322 = vmatprep.subr.bf16.mxu0 0
    %323 = vmatpush1.bf16.msra.mxu0 0
    %324 = vmatprep.subr.bf16.mxu0 0
    %325 = vmatpush1.bf16.msra.mxu0 0
    %326 = vmatprep.subr.bf16.mxu0 0
    %327 = vmatpush1.bf16.msra.mxu0 0
    %328 = vmatprep.subr.bf16.mxu0 0
    %329 = vmatpush1.bf16.msra.mxu0 0
    %330 = vmatprep.subr.bf16.mxu0 0
    %331 = vmatpush1.bf16.msra.mxu0 0
    %332 = vmatprep.mubr.bf16.mxu0 0
    %333 = vmatmul.mubr.bf16.gmra.mrb[0].mxu0 %v298
    %v334 = vpop.f32.mrb[0].mxu0
    %v335 = vadd.f32 0.0, %v334
    %v336 = vpop.f32.mrb[0].mxu0
    %v337 = vpop.f32.mrb[0].mxu0
    %v338 = vpop.f32.mrb[0].mxu0
    %339 = vdwg.mxu0
    %s340 = scalar_lea.vmem [#allocation2], 20
    %v341 = vld [vmem:[%s340] sm:$0xf]
    %v342 = vadd.f32 %v341, %v335
    %v343 = vtanh.pop %v342
    %v344 = vpack.c.bf16 %v343, %v343
    %v346 = vsel %vm57, %v344, 0
    %348 = vmatprep.subr.bf16.mxu0 0
    %349 = vmatpush1.bf16.msra.mxu0 %v53
    %350 = vmatprep.subr.bf16.mxu0 0
    %351 = vmatpush1.bf16.msra.mxu0 %v54
    %352 = vmatprep.subr.bf16.mxu0 0
    %353 = vmatpush1.bf16.msra.mxu0 0
    %354 = vmatprep.subr.bf16.mxu0 0
    %355 = vmatpush1.bf16.msra.mxu0 0
    %356 = vmatprep.subr.bf16.mxu0 0
    %357 = vmatpush1.bf16.msra.mxu0 0
    %358 = vmatprep.subr.bf16.mxu0 0
    %359 = vmatpush1.bf16.msra.mxu0 0
    %360 = vmatprep.subr.bf16.mxu0 0
    %361 = vmatpush1.bf16.msra.mxu0 0
    %362 = vmatprep.subr.bf16.mxu0 0
    %363 = vmatpush1.bf16.msra.mxu0 0
    %364 = vmatprep.subr.bf16.mxu0 0
    %365 = vmatpush1.bf16.msra.mxu0 0
    %366 = vmatprep.subr.bf16.mxu0 0
    %367 = vmatpush1.bf16.msra.mxu0 0
    %368 = vmatprep.subr.bf16.mxu0 0
    %369 = vmatpush1.bf16.msra.mxu0 0
    %370 = vmatprep.subr.bf16.mxu0 0
    %371 = vmatpush1.bf16.msra.mxu0 0
    %372 = vmatprep.subr.bf16.mxu0 0
    %373 = vmatpush1.bf16.msra.mxu0 0
    %374 = vmatprep.subr.bf16.mxu0 0
    %375 = vmatpush1.bf16.msra.mxu0 0
    %376 = vmatprep.subr.bf16.mxu0 0
    %377 = vmatpush1.bf16.msra.mxu0 0
    %378 = vmatprep.subr.bf16.mxu0 0
    %379 = vmatpush1.bf16.msra.mxu0 0
    %380 = vmatprep.mubr.bf16.mxu0 0
    %381 = vmatmul.mubr.bf16.gmra.mrb[0].mxu0 %v346
    %v382 = vpop.f32.mrb[0].mxu0
    %v383 = vadd.f32 0.0, %v382
    %v384 = vpop.f32.mrb[0].mxu0
    %v385 = vpop.f32.mrb[0].mxu0
    %v386 = vpop.f32.mrb[0].mxu0
    %387 = vdwg.mxu0
    %s388 = scalar_lea.vmem [#allocation2], 24
    %v389 = vld [vmem:[%s388] sm:$0xf]
    %v390 = vadd.f32 %v389, %v383
    %v391 = vtanh.pop %v390
    %v392 = vpack.c.bf16 %v391, %v391
    %v394 = vsel %vm57, %v392, 0
    %396 = vmatprep.subr.bf16.mxu0 0
    %397 = vmatpush1.bf16.msra.mxu0 %v53
    %398 = vmatprep.subr.bf16.mxu0 0
    %399 = vmatpush1.bf16.msra.mxu0 %v54
    %400 = vmatprep.subr.bf16.mxu0 0
    %401 = vmatpush1.bf16.msra.mxu0 0
    %402 = vmatprep.subr.bf16.mxu0 0
    %403 = vmatpush1.bf16.msra.mxu0 0
    %404 = vmatprep.subr.bf16.mxu0 0
    %405 = vmatpush1.bf16.msra.mxu0 0
    %406 = vmatprep.subr.bf16.mxu0 0
    %407 = vmatpush1.bf16.msra.mxu0 0
    %408 = vmatprep.subr.bf16.mxu0 0
    %409 = vmatpush1.bf16.msra.mxu0 0
    %410 = vmatprep.subr.bf16.mxu0 0
    %411 = vmatpush1.bf16.msra.mxu0 0
    %412 = vmatprep.subr.bf16.mxu0 0
    %413 = vmatpush1.bf16.msra.mxu0 0
    %414 = vmatprep.subr.bf16.mxu0 0
    %415 = vmatpush1.bf16.msra.mxu0 0
    %416 = vmatprep.subr.bf16.mxu0 0
    %417 = vmatpush1.bf16.msra.mxu0 0
    %418 = vmatprep.subr.bf16.mxu0 0
    %419 = vmatpush1.bf16.msra.mxu0 0
    %420 = vmatprep.subr.bf16.mxu0 0
    %421 = vmatpush1.bf16.msra.mxu0 0
    %422 = vmatprep.subr.bf16.mxu0 0
    %423 = vmatpush1.bf16.msra.mxu0 0
    %424 = vmatprep.subr.bf16.mxu0 0
    %425 = vmatpush1.bf16.msra.mxu0 0
    %426 = vmatprep.subr.bf16.mxu0 0
    %427 = vmatpush1.bf16.msra.mxu0 0
    %428 = vmatprep.mubr.bf16.mxu0 0
    %429 = vmatmul.mubr.bf16.gmra.mrb[0].mxu0 %v394
    %v430 = vpop.f32.mrb[0].mxu0
    %v431 = vadd.f32 0.0, %v430
    %v432 = vpop.f32.mrb[0].mxu0
    %v433 = vpop.f32.mrb[0].mxu0
    %v434 = vpop.f32.mrb[0].mxu0
    %435 = vdwg.mxu0
    %s436 = scalar_lea.vmem [#allocation2], 28
    %v437 = vld [vmem:[%s436] sm:$0xf]
    %v438 = vadd.f32 %v437, %v431
    %v439 = vtanh.pop %v438
    %vm440 = vcmask 257024
    %v441 = vsel %vm440, %v439, -inf
    %442 = vmax.xlane.f32.xlu0 %v441
    %v443 = vpop.xlane.xlu0 %442
    %v444 = vsub.f32 %v439, %v443
    %v445 = vmul.f32 %v444, 1.442695
    %v446 = vpow.pop %v445
    %v447 = vsel %vm440, %v446, 0.0
    %448 = vadd.xlane.f32.xlu0 %v447
    %v449 = vpop.xlane.xlu0 %448
    %v450 = vrcp.pop %v449
    %v451 = vmul.f32 %v446, %v450
    %452 = vst.msk [vmem:[#allocation7] sm:$0xf] %vm440, %v451
    // Predicated region
    $region18: #{tpu_custom_call.1} parent=1 // pred_check
      _
    $region19: #{tpu_custom_call.1} parent=1 // pred_check_branch
      %454 = sbr.rel (0) target = $region21
    $region20: #{tpu_custom_call.1} parent=1 // pred_region
      %s456 = ssub.s32 64, 64
      %457 = vsyncadd [#allocation4], %s456
      %s459 = sshll.u32 [#allocation7], 4
      %s460 = int_to_ptr.vmem [resolvable:$true] %s459
      %462 = dma.vmem_to_hbm [thread:$0]  %s460, 64, %s2, [#allocation4]
    $region21: #{tpu_custom_call.1} parent=1 // pred_fallthru
      _
    // Predicated region
    $region22: #{tpu_custom_call.1} parent=1 // pred_check
      _
    $region23: #{tpu_custom_call.1} parent=1 // pred_check_branch
      %464 = sbr.rel (0) target = $region25
    $region24: #{tpu_custom_call.1} parent=1 // pred_region
      %465 = dma.done [#allocation4], 64
    $region25: #{tpu_custom_call.1} parent=1 // pred_fallthru
      _
    %466 = vsyncpa [#allocation3], 1
    %467 = vsyncpa [#allocation6], 1
    %468 = vsyncpa [#allocation4], 1

</llo_original>
